<compile_context>
chip_gen: v6e
topology: v6e:2x2x1
jax: 0.10.0
libtpu: 0.0.40
codegen_flags: <defaults>
</compile_context>

<pallas_src>
import functools

import jax
import jax.numpy as jnp
from jax.experimental import pallas as pl
from jax.experimental.pallas import tpu as pltpu


# Fixed hidden layer widths from the PyTorch module definition.
_HIDDEN_SIZES = (50, 40, 20, 10)

# Rows per grid step.  Padded fp32 activations cost ~3 KB/row, so 1024 rows is
# ~3 MB of in-kernel temporaries and a few hundred KB per pipeline buffer --
# comfortably inside every generation's scoped VMEM while amortizing per-step
# overhead and MXU weight-push/drain.
_MAX_TILE_B = 1024


def _round_up(x, m):
    return (x + m - 1) // m * m


def _device_kind():
    try:
        return jax.devices()[0].device_kind.lower()
    except Exception:  # pragma: no cover - e.g. no devices at all
        return ""


# ----------------------------------------------------------------------------- kernel
def _mlp_kernel(x_ref,
                w1_ref, b1_ref,
                w2_ref, b2_ref,
                w3_ref, b3_ref,
                w4_ref, b4_ref,
                w5_ref, b5_ref,
                o_ref, *, use_bf16):
    """Fused 5-layer MLP with Tanh activations between hidden layers."""
    compute_dtype = jnp.bfloat16 if use_bf16 else jnp.float32
    h = x_ref[...].astype(compute_dtype)

    def linear(h, w_ref, b_ref):
        # h: [TILE_B, in], w: [in, out], b: [1, out]; always accumulate in fp32.
        w = w_ref[...]
        if w.dtype != h.dtype:          # weights are pre-cast outside; no-op normally
            w = w.astype(h.dtype)
        return (jnp.dot(h, w, preferred_element_type=jnp.float32)
                + b_ref[...].astype(jnp.float32))

    # tanh runs in compute_dtype (bf16 on v6e/v7x -> 2x EUP throughput).
    h = jnp.tanh(linear(h, w1_ref, b1_ref).astype(compute_dtype))
    h = jnp.tanh(linear(h, w2_ref, b2_ref).astype(compute_dtype))
    h = jnp.tanh(linear(h, w3_ref, b3_ref).astype(compute_dtype))
    h = jnp.tanh(linear(h, w4_ref, b4_ref).astype(compute_dtype))
    out = linear(h, w5_ref, b5_ref)     # final layer: fp32, no activation
    o_ref[...] = out.astype(o_ref.dtype)


# ----------------------------------------------------------------------------- params
def init_params(key, input_dim, output_dim, dtype=jnp.float32):
    """Deterministic init mirroring PyTorch nn.Linear default (U(-1/sqrt(fan_in), +))."""
    dims = (input_dim,) + _HIDDEN_SIZES + (output_dim,)
    params = []
    for i in range(len(dims) - 1):
        fan_in, fan_out = dims[i], dims[i + 1]
        key, kw, kb = jax.random.split(key, 3)
        bound = 1.0 / jnp.sqrt(float(fan_in))
        # store weight as [in, out] so the kernel does x @ W
        w = jax.random.uniform(kw, (fan_in, fan_out), dtype, -bound, bound)
        b = jax.random.uniform(kb, (1, fan_out), dtype, -bound, bound)
        params.append((w, b))
    return params


# ----------------------------------------------------------------------------- forward
@functools.partial(jax.jit, static_argnames=("tile_b", "use_bf16", "core_parallel"))
def _forward_impl(x, params, *, tile_b, use_bf16, core_parallel):
    batch, input_dim = x.shape
    output_dim = params[-1][0].shape[1]

    if use_bf16:
        # Cast weights once (tiny: ~20 KB total) instead of per grid step in-kernel.
        # Biases stay fp32 so the bias add happens on the fp32 accumulator.
        params = [(w.astype(jnp.bfloat16), b) for (w, b) in params]

    grid = (pl.cdiv(batch, tile_b),)     # ragged last tile handled by Pallas masking

    flat_args = [x]
    in_specs = [pl.BlockSpec((tile_b, input_dim), lambda i: (i, 0))]
    for w, b in params:
        flat_args.extend([w, b])
        # Constant index_map -> weights/biases stay VMEM-resident; Pallas skips
        # the re-DMA when the block index is unchanged between grid steps.
        in_specs.append(pl.BlockSpec(w.shape, lambda i: (0, 0)))
        in_specs.append(pl.BlockSpec(b.shape, lambda i: (0, 0)))

    semantics = (pltpu.CORE_PARALLEL,) if core_parallel else ("parallel",)

    return pl.pallas_call(
        functools.partial(_mlp_kernel, use_bf16=use_bf16),
        out_shape=jax.ShapeDtypeStruct((batch, output_dim), x.dtype),
        grid=grid,
        in_specs=in_specs,
        out_specs=pl.BlockSpec((tile_b, output_dim), lambda i: (i, 0)),
        compiler_params=pltpu.CompilerParams(dimension_semantics=semantics),
    )(*flat_args)


def neural_network_forward(x, params, output_dim=None, use_bf16=None,
                           max_tile_b=_MAX_TILE_B):
    """x: [B, input_dim] float32 -> [B, output_dim] float32.

    use_bf16=None -> auto: bf16 activations (fp32 accumulation) on v6e/v7x,
    fp32 everywhere on v5e and older (no bf16 VPU/EUP there).
    """
    kind = _device_kind()
    if use_bf16 is None:
        use_bf16 = ("v6" in kind) or ("v7" in kind)

    n_cores = 2 if "v7" in kind else 1        # v7x: 2 TensorCores per chip
    batch = x.shape[0]

    # Rows per grid step: big enough to amortize per-step overhead, small enough
    # that every TensorCore gets at least one step; multiple of 8 for sublanes.
    tile_b = min(max_tile_b, _round_up(max(1, pl.cdiv(batch, n_cores)), 8))
    if tile_b >= batch:
        tile_b = batch                        # single full-array block (always legal)
    core_parallel = (n_cores > 1) and (pl.cdiv(batch, tile_b) >= n_cores)

    if output_dim is not None:
        assert output_dim == params[-1][0].shape[1]

    return _forward_impl(x, params, tile_b=tile_b, use_bf16=use_bf16,
                         core_parallel=core_parallel)


# ----------------------------------------------------------------------------- reference
def _reference_forward(x, params):
    h = x
    for i, (w, b) in enumerate(params):
        h = h @ w + b
        if i < len(params) - 1:
            h = jnp.tanh(h)
    return h


if __name__ == "__main__":
    input_dim = 32
    output_dim = 8

    key = jax.random.PRNGKey(0)
    key_x, key_x2, key_p = jax.random.split(key, 3)
    params = init_params(key_p, input_dim, output_dim)

    # --- small batch: single full-array block, no padding, no slicing ---------
    batch = 10
    x = jax.random.normal(key_x, (batch, input_dim), dtype=jnp.float32)
    out = jax.block_until_ready(
        neural_network_forward(x, params, output_dim, use_bf16=False))
    ref = _reference_forward(x, params)
    assert out.shape == (batch, output_dim)
    assert jnp.allclose(out, ref, atol=1e-5, rtol=1e-5), "fp32 mismatch vs reference"

    # --- multi-tile batch with a ragged last tile (300 = 128+128+44) ----------
    batch2 = 300
    x2 = jax.random.normal(key_x2, (batch2, input_dim), dtype=jnp.float32)
    out2 = jax.block_until_ready(
        neural_network_forward(x2, params, output_dim, use_bf16=False,
                               max_tile_b=128))
    ref2 = _reference_forward(x2, params)
    assert out2.shape == (batch2, output_dim)
    assert jnp.allclose(out2, ref2, atol=1e-5, rtol=1e-5), "ragged multi-tile mismatch"

    # --- auto precision path (bf16 tanh on v6e/v7x, fp32 on v5e) --------------
    out_auto = jax.block_until_ready(
        neural_network_forward(x2, params, output_dim))
    assert out_auto.shape == (batch2, output_dim)
    assert jnp.allclose(out_auto, ref2, atol=2e-1, rtol=2e-1), "auto-precision mismatch"

    print("KERNEL_OK")
</pallas_src>

<mosaic_0001>
module attributes {stable_mosaic.version = 11 : i64} {
  func.func @_mlp_kernel(%arg0: i32, %arg1: memref<10x32xf32, #tpu.memory_space<vmem>>, %arg2: memref<32x50xf32, #tpu.memory_space<vmem>>, %arg3: memref<1x50xf32, #tpu.memory_space<vmem>>, %arg4: memref<50x40xf32, #tpu.memory_space<vmem>>, %arg5: memref<1x40xf32, #tpu.memory_space<vmem>>, %arg6: memref<40x20xf32, #tpu.memory_space<vmem>>, %arg7: memref<1x20xf32, #tpu.memory_space<vmem>>, %arg8: memref<20x10xf32, #tpu.memory_space<vmem>>, %arg9: memref<1x10xf32, #tpu.memory_space<vmem>>, %arg10: memref<10x8xf32, #tpu.memory_space<vmem>>, %arg11: memref<1x8xf32, #tpu.memory_space<vmem>>, %arg12: memref<10x8xf32, #tpu.memory_space<vmem>>) attributes {dimension_semantics = [#tpu.dimension_semantics<parallel>], iteration_bounds = array<i64: 1>, scalar_prefetch = 0 : i64, scratch_operands = 0 : i64, tpu.core_type = #tpu.core_type<tc>, window_params = [{transform_indices = @transform_0, window_bounds = array<i64: 10, 32>}, {pipeline_mode = #tpu.pipeline_mode<synchronous>, transform_indices = @transform_1, window_bounds = array<i64: 32, 50>}, {pipeline_mode = #tpu.pipeline_mode<synchronous>, transform_indices = @transform_2, window_bounds = array<i64: 1, 50>}, {pipeline_mode = #tpu.pipeline_mode<synchronous>, transform_indices = @transform_3, window_bounds = array<i64: 50, 40>}, {pipeline_mode = #tpu.pipeline_mode<synchronous>, transform_indices = @transform_4, window_bounds = array<i64: 1, 40>}, {pipeline_mode = #tpu.pipeline_mode<synchronous>, transform_indices = @transform_5, window_bounds = array<i64: 40, 20>}, {pipeline_mode = #tpu.pipeline_mode<synchronous>, transform_indices = @transform_6, window_bounds = array<i64: 1, 20>}, {pipeline_mode = #tpu.pipeline_mode<synchronous>, transform_indices = @transform_7, window_bounds = array<i64: 20, 10>}, {pipeline_mode = #tpu.pipeline_mode<synchronous>, transform_indices = @transform_8, window_bounds = array<i64: 1, 10>}, {pipeline_mode = #tpu.pipeline_mode<synchronous>, transform_indices = @transform_9, window_bounds = array<i64: 10, 8>}, {pipeline_mode = #tpu.pipeline_mode<synchronous>, transform_indices = @transform_10, window_bounds = array<i64: 1, 8>}, {transform_indices = @transform_11, window_bounds = array<i64: 10, 8>}]} {
    %c0 = arith.constant 0 : index
    %c0_0 = arith.constant 0 : index
    %0 = vector.load %arg1[%c0, %c0_0] : memref<10x32xf32, #tpu.memory_space<vmem>>, vector<10x32xf32>
    %c0_1 = arith.constant 0 : index
    %c0_2 = arith.constant 0 : index
    %1 = vector.load %arg2[%c0_1, %c0_2] : memref<32x50xf32, #tpu.memory_space<vmem>>, vector<32x50xf32>
    %cst = arith.constant dense<0.000000e+00> : vector<10x50xf32>
    %2 = tpu.matmul %0, %1, %cst {dimension_numbers = #tpu.dot_dimension_numbers<[1], [0], [0], [1], [0, 0, 1, 1], [], []>} : vector<10x32xf32>, vector<32x50xf32>, vector<10x50xf32> -> vector<10x50xf32>
    %c0_3 = arith.constant 0 : index
    %c0_4 = arith.constant 0 : index
    %3 = vector.load %arg3[%c0_3, %c0_4] : memref<1x50xf32, #tpu.memory_space<vmem>>, vector<1x50xf32>
    %4 = vector.broadcast %3 : vector<1x50xf32> to vector<10x50xf32>
    %5 = arith.addf %2, %4 : vector<10x50xf32>
    %6 = math.tanh %5 : vector<10x50xf32>
    %c0_5 = arith.constant 0 : index
    %c0_6 = arith.constant 0 : index
    %7 = vector.load %arg4[%c0_5, %c0_6] : memref<50x40xf32, #tpu.memory_space<vmem>>, vector<50x40xf32>
    %cst_7 = arith.constant dense<0.000000e+00> : vector<10x40xf32>
    %8 = tpu.matmul %6, %7, %cst_7 {dimension_numbers = #tpu.dot_dimension_numbers<[1], [0], [0], [1], [0, 0, 1, 1], [], []>} : vector<10x50xf32>, vector<50x40xf32>, vector<10x40xf32> -> vector<10x40xf32>
    %c0_8 = arith.constant 0 : index
    %c0_9 = arith.constant 0 : index
    %9 = vector.load %arg5[%c0_8, %c0_9] : memref<1x40xf32, #tpu.memory_space<vmem>>, vector<1x40xf32>
    %10 = vector.broadcast %9 : vector<1x40xf32> to vector<10x40xf32>
    %11 = arith.addf %8, %10 : vector<10x40xf32>
    %12 = math.tanh %11 : vector<10x40xf32>
    %c0_10 = arith.constant 0 : index
    %c0_11 = arith.constant 0 : index
    %13 = vector.load %arg6[%c0_10, %c0_11] : memref<40x20xf32, #tpu.memory_space<vmem>>, vector<40x20xf32>
    %cst_12 = arith.constant dense<0.000000e+00> : vector<10x20xf32>
    %14 = tpu.matmul %12, %13, %cst_12 {dimension_numbers = #tpu.dot_dimension_numbers<[1], [0], [0], [1], [0, 0, 1, 1], [], []>} : vector<10x40xf32>, vector<40x20xf32>, vector<10x20xf32> -> vector<10x20xf32>
    %c0_13 = arith.constant 0 : index
    %c0_14 = arith.constant 0 : index
    %15 = vector.load %arg7[%c0_13, %c0_14] : memref<1x20xf32, #tpu.memory_space<vmem>>, vector<1x20xf32>
    %16 = vector.broadcast %15 : vector<1x20xf32> to vector<10x20xf32>
    %17 = arith.addf %14, %16 : vector<10x20xf32>
    %18 = math.tanh %17 : vector<10x20xf32>
    %c0_15 = arith.constant 0 : index
    %c0_16 = arith.constant 0 : index
    %19 = vector.load %arg8[%c0_15, %c0_16] : memref<20x10xf32, #tpu.memory_space<vmem>>, vector<20x10xf32>
    %cst_17 = arith.constant dense<0.000000e+00> : vector<10x10xf32>
    %20 = tpu.matmul %18, %19, %cst_17 {dimension_numbers = #tpu.dot_dimension_numbers<[1], [0], [0], [1], [0, 0, 1, 1], [], []>} : vector<10x20xf32>, vector<20x10xf32>, vector<10x10xf32> -> vector<10x10xf32>
    %c0_18 = arith.constant 0 : index
    %c0_19 = arith.constant 0 : index
    %21 = vector.load %arg9[%c0_18, %c0_19] : memref<1x10xf32, #tpu.memory_space<vmem>>, vector<1x10xf32>
    %22 = vector.broadcast %21 : vector<1x10xf32> to vector<10x10xf32>
    %23 = arith.addf %20, %22 : vector<10x10xf32>
    %24 = math.tanh %23 : vector<10x10xf32>
    %c0_20 = arith.constant 0 : index
    %c0_21 = arith.constant 0 : index
    %25 = vector.load %arg10[%c0_20, %c0_21] : memref<10x8xf32, #tpu.memory_space<vmem>>, vector<10x8xf32>
    %cst_22 = arith.constant dense<0.000000e+00> : vector<10x8xf32>
    %26 = tpu.matmul %24, %25, %cst_22 {dimension_numbers = #tpu.dot_dimension_numbers<[1], [0], [0], [1], [0, 0, 1, 1], [], []>} : vector<10x10xf32>, vector<10x8xf32>, vector<10x8xf32> -> vector<10x8xf32>
    %c0_23 = arith.constant 0 : index
    %c0_24 = arith.constant 0 : index
    %27 = vector.load %arg11[%c0_23, %c0_24] : memref<1x8xf32, #tpu.memory_space<vmem>>, vector<1x8xf32>
    %28 = vector.broadcast %27 : vector<1x8xf32> to vector<10x8xf32>
    %29 = arith.addf %26, %28 : vector<10x8xf32>
    %c0_25 = arith.constant 0 : index
    %c0_26 = arith.constant 0 : index
    %30 = vector.load %arg12[%c0_25, %c0_26] : memref<10x8xf32, #tpu.memory_space<vmem>>, vector<10x8xf32>
    tpu.vector_store %arg12[%c0_25, %c0_26], %29 {strides = array<i32>} : memref<10x8xf32, #tpu.memory_space<vmem>>, vector<10x8xf32>,
    return
  }
  func.func @transform_0(%arg0: i32) -> (i32, i32) {
    %c0_i32 = arith.constant 0 : i32
    %c0_i32_0 = arith.constant 0 : i32
    return %arg0, %c0_i32 : i32, i32
  }
  func.func @transform_1(%arg0: i32) -> (i32, i32) {
    %c0_i32 = arith.constant 0 : i32
    %c0_i32_0 = arith.constant 0 : i32
    %c0_i32_1 = arith.constant 0 : i32
    return %c0_i32, %c0_i32_0 : i32, i32
  }
  func.func @transform_2(%arg0: i32) -> (i32, i32) {
    %c0_i32 = arith.constant 0 : i32
    %c0_i32_0 = arith.constant 0 : i32
    %c0_i32_1 = arith.constant 0 : i32
    return %c0_i32, %c0_i32_0 : i32, i32
  }
  func.func @transform_3(%arg0: i32) -> (i32, i32) {
    %c0_i32 = arith.constant 0 : i32
    %c0_i32_0 = arith.constant 0 : i32
    %c0_i32_1 = arith.constant 0 : i32
    return %c0_i32, %c0_i32_0 : i32, i32
  }
  func.func @transform_4(%arg0: i32) -> (i32, i32) {
    %c0_i32 = arith.constant 0 : i32
    %c0_i32_0 = arith.constant 0 : i32
    %c0_i32_1 = arith.constant 0 : i32
    return %c0_i32, %c0_i32_0 : i32, i32
  }
  func.func @transform_5(%arg0: i32) -> (i32, i32) {
    %c0_i32 = arith.constant 0 : i32
    %c0_i32_0 = arith.constant 0 : i32
    %c0_i32_1 = arith.constant 0 : i32
    return %c0_i32, %c0_i32_0 : i32, i32
  }
  func.func @transform_6(%arg0: i32) -> (i32, i32) {
    %c0_i32 = arith.constant 0 : i32
    %c0_i32_0 = arith.constant 0 : i32
    %c0_i32_1 = arith.constant 0 : i32
    return %c0_i32, %c0_i32_0 : i32, i32
  }
  func.func @transform_7(%arg0: i32) -> (i32, i32) {
    %c0_i32 = arith.constant 0 : i32
    %c0_i32_0 = arith.constant 0 : i32
    %c0_i32_1 = arith.constant 0 : i32
    return %c0_i32, %c0_i32_0 : i32, i32
  }
  func.func @transform_8(%arg0: i32) -> (i32, i32) {
    %c0_i32 = arith.constant 0 : i32
    %c0_i32_0 = arith.constant 0 : i32
    %c0_i32_1 = arith.constant 0 : i32
    return %c0_i32, %c0_i32_0 : i32, i32
  }
  func.func @transform_9(%arg0: i32) -> (i32, i32) {
    %c0_i32 = arith.constant 0 : i32
    %c0_i32_0 = arith.constant 0 : i32
    %c0_i32_1 = arith.constant 0 : i32
    return %c0_i32, %c0_i32_0 : i32, i32
  }
  func.func @transform_10(%arg0: i32) -> (i32, i32) {
    %c0_i32 = arith.constant 0 : i32
    %c0_i32_0 = arith.constant 0 : i32
    %c0_i32_1 = arith.constant 0 : i32
    return %c0_i32, %c0_i32_0 : i32, i32
  }
  func.func @transform_11(%arg0: i32) -> (i32, i32) {
    %c0_i32 = arith.constant 0 : i32
    %c0_i32_0 = arith.constant 0 : i32
    return %arg0, %c0_i32 : i32, i32
  }
}

</mosaic_0001>

<llo_original>
// kernel: _forward_impl.1
$region0: #{_forward_impl.1}
  #allocation0 [shape = 'u32[]', space=smem, size = 0x4, offset = 0x4, fixed_abs, tag = 'smem constant byte address 0x4 - core index']
  #allocation1 [shape = 'u32[144,128]{1,0:T(1,128)}', space=vmem, size = 0x12000, scoped, tag = 'internal scratch']
  %s0 = inlined_call_operand.vmem [shape: f32[10,32], index: 0, kind: input, shape index: {}]
  %s1 = inlined_call_operand.vmem [shape: f32[32,50], index: 1, kind: input, shape index: {}]
  %s2 = inlined_call_operand.vmem [shape: f32[1,50], index: 2, kind: input, shape index: {}]
  %s3 = inlined_call_operand.vmem [shape: f32[50,40], index: 3, kind: input, shape index: {}]
  %s4 = inlined_call_operand.vmem [shape: f32[1,40], index: 4, kind: input, shape index: {}]
  %s5 = inlined_call_operand.vmem [shape: f32[40,20], index: 5, kind: input, shape index: {}]
  %s6 = inlined_call_operand.vmem [shape: f32[1,20], index: 6, kind: input, shape index: {}]
  %s7 = inlined_call_operand.vmem [shape: f32[20,10], index: 7, kind: input, shape index: {}]
  %s8 = inlined_call_operand.vmem [shape: f32[1,10], index: 8, kind: input, shape index: {}]
  %s9 = inlined_call_operand.vmem [shape: f32[10,8], index: 9, kind: input, shape index: {}]
  %s10 = inlined_call_operand.vmem [shape: f32[1,8], index: 10, kind: input, shape index: {}]
  %s11 = inlined_call_operand.vmem [shape: f32[10,8], index: 11, kind: output, shape index: {}]
  %s12 = sld [smem:[#allocation0]]
  $region54: #{_forward_impl.1} parent=0
    _
  %s14 = ssub.s32 1, %s12
  %s15 = scalar_select 0, %s14, %s12
  // Predicated region
  $region2: #{_forward_impl.1} parent=0 // pred_check
    _
  $region3: #{_forward_impl.1} parent=0 // pred_check_branch
    %17 = sbr.rel (0) target = $region5
  $region4: #{_forward_impl.1} parent=0 // pred_region
    _
  $region5: #{_forward_impl.1} parent=0 // pred_fallthru
    _
  // Predicated region
  $region6: #{_forward_impl.1} parent=0 // pred_check
    _
  $region7: #{_forward_impl.1} parent=0 // pred_check_branch
    %19 = sbr.rel (0) target = $region9
  $region8: #{_forward_impl.1} parent=0 // pred_region
    _
  $region9: #{_forward_impl.1} parent=0 // pred_fallthru
    _
  // Predicated region
  $region10: #{_forward_impl.1} parent=0 // pred_check
    _
  $region11: #{_forward_impl.1} parent=0 // pred_check_branch
    %21 = sbr.rel (0) target = $region13
  $region12: #{_forward_impl.1} parent=0 // pred_region
    _
  $region13: #{_forward_impl.1} parent=0 // pred_fallthru
    _
  // Predicated region
  $region14: #{_forward_impl.1} parent=0 // pred_check
    _
  $region15: #{_forward_impl.1} parent=0 // pred_check_branch
    %23 = sbr.rel (0) target = $region17
  $region16: #{_forward_impl.1} parent=0 // pred_region
    _
  $region17: #{_forward_impl.1} parent=0 // pred_fallthru
    _
  // Predicated region
  $region18: #{_forward_impl.1} parent=0 // pred_check
    _
  $region19: #{_forward_impl.1} parent=0 // pred_check_branch
    %25 = sbr.rel (0) target = $region21
  $region20: #{_forward_impl.1} parent=0 // pred_region
    _
  $region21: #{_forward_impl.1} parent=0 // pred_fallthru
    _
  // Predicated region
  $region22: #{_forward_impl.1} parent=0 // pred_check
    _
  $region23: #{_forward_impl.1} parent=0 // pred_check_branch
    %27 = sbr.rel (0) target = $region25
  $region24: #{_forward_impl.1} parent=0 // pred_region
    _
  $region25: #{_forward_impl.1} parent=0 // pred_fallthru
    _
  // Predicated region
  $region26: #{_forward_impl.1} parent=0 // pred_check
    _
  $region27: #{_forward_impl.1} parent=0 // pred_check_branch
    %29 = sbr.rel (0) target = $region29
  $region28: #{_forward_impl.1} parent=0 // pred_region
    _
  $region29: #{_forward_impl.1} parent=0 // pred_fallthru
    _
  // Predicated region
  $region30: #{_forward_impl.1} parent=0 // pred_check
    _
  $region31: #{_forward_impl.1} parent=0 // pred_check_branch
    %31 = sbr.rel (0) target = $region33
  $region32: #{_forward_impl.1} parent=0 // pred_region
    _
  $region33: #{_forward_impl.1} parent=0 // pred_fallthru
    _
  // Predicated region
  $region34: #{_forward_impl.1} parent=0 // pred_check
    _
  $region35: #{_forward_impl.1} parent=0 // pred_check_branch
    %33 = sbr.rel (0) target = $region37
  $region36: #{_forward_impl.1} parent=0 // pred_region
    _
  $region37: #{_forward_impl.1} parent=0 // pred_fallthru
    _
  // Predicated region
  $region38: #{_forward_impl.1} parent=0 // pred_check
    _
  $region39: #{_forward_impl.1} parent=0 // pred_check_branch
    %35 = sbr.rel (0) target = $region41
  $region40: #{_forward_impl.1} parent=0 // pred_region
    _
  $region41: #{_forward_impl.1} parent=0 // pred_fallthru
    _
  // Predicated region
  $region42: #{_forward_impl.1} parent=0 // pred_check
    _
  $region43: #{_forward_impl.1} parent=0 // pred_check_branch
    %37 = sbr.rel (0) target = $region45
  $region44: #{_forward_impl.1} parent=0 // pred_region
    _
  $region45: #{_forward_impl.1} parent=0 // pred_fallthru
    _
  %v38 = vld [vmem:[%s0] sm:$0xff]
  %v39 = vld [vmem:[%s0 + $0x8] sm:$0x3]
  %v40 = vld [vmem:[%s1] sm:$0xff]
  %v41 = vld [vmem:[%s1 + $0x8] sm:$0xff]
  %v42 = vld [vmem:[%s1 + $0x10] sm:$0xff]
  %v43 = vld [vmem:[%s1 + $0x18] sm:$0xff]
  %v44 = vld [vmem:[%s2] sm:$0x1]
  %v46 = vlaneseq
  %v47 = vshrl.u32 %v46, 7
  %v48 = vsub.s32 0, %v47
  %v49 = vrot.slane %v44, %v48
  %vm51 = vcmask 261120
  %v53 = vsel %vm51, %v38, 0
  %v56 = vsel %vm51, %v39, 0
  %58 = vmatprep.subr.mxu0 0.0
  %59 = vmatpush1.msra.mxu0 0.0
  %60 = vmatprep.subr.mxu0 0.0
  %61 = vmatpush1.msra.mxu0 0.0
  %62 = vmatprep.subr.mxu0 0.0
  %63 = vmatpush1.msra.mxu0 0.0
  %64 = vmatprep.subr.mxu0 0.0
  %65 = vmatpush1.msra.mxu0 0.0
  %66 = vmatprep.subr.mxu0 0.0
  %67 = vmatpush1.msra.mxu0 0.0
  %68 = vmatprep.subr.mxu0 0.0
  %69 = vmatpush1.msra.mxu0 0.0
  %70 = vmatprep.subr.mxu0 0.0
  %71 = vmatpush1.msra.mxu0 0.0
  %72 = vmatprep.subr.mxu0 0.0
  %73 = vmatpush1.msra.mxu0 0.0
  %74 = vmatprep.subr.mxu0 0.0
  %75 = vmatpush1.msra.mxu0 0.0
  %76 = vmatprep.subr.mxu0 0.0
  %77 = vmatpush1.msra.mxu0 0.0
  %78 = vmatprep.subr.mxu0 0.0
  %79 = vmatpush1.msra.mxu0 0.0
  %80 = vmatprep.subr.mxu0 0.0
  %81 = vmatpush1.msra.mxu0 0.0
  %82 = vmatprep.subr.mxu0 0.0
  %83 = vmatpush1.msra.mxu0 %v43
  %84 = vmatprep.subr.mxu0 0.0
  %85 = vmatpush1.msra.mxu0 %v42
  %86 = vmatprep.subr.mxu0 0.0
  %87 = vmatpush1.msra.mxu0 %v41
  %88 = vmatprep.subr.mxu0 0.0
  %89 = vmatpush1.msra.mxu0 %v40
  %90 = vmatprep.subr.mxu0 0.0
  %91 = vmatpush2.msra.mxu0 0.0
  %92 = vmatprep.subr.mxu0 0.0
  %93 = vmatpush2.msra.mxu0 0.0
  %94 = vmatprep.subr.mxu0 0.0
  %95 = vmatpush2.msra.mxu0 0.0
  %96 = vmatprep.subr.mxu0 0.0
  %97 = vmatpush2.msra.mxu0 0.0
  %98 = vmatprep.subr.mxu0 0.0
  %99 = vmatpush2.msra.mxu0 0.0
  %100 = vmatprep.subr.mxu0 0.0
  %101 = vmatpush2.msra.mxu0 0.0
  %102 = vmatprep.subr.mxu0 0.0
  %103 = vmatpush2.msra.mxu0 0.0
  %104 = vmatprep.subr.mxu0 0.0
  %105 = vmatpush2.msra.mxu0 0.0
  %106 = vmatprep.subr.mxu0 0.0
  %107 = vmatpush2.msra.mxu0 0.0
  %108 = vmatprep.subr.mxu0 0.0
  %109 = vmatpush2.msra.mxu0 0.0
  %110 = vmatprep.subr.mxu0 0.0
  %111 = vmatpush2.msra.mxu0 0.0
  %112 = vmatprep.subr.mxu0 0.0
  %113 = vmatpush2.msra.mxu0 0.0
  %114 = vmatprep.subr.mxu0 0.0
  %115 = vmatpush2.msra.mxu0 0.0
  %116 = vmatprep.subr.mxu0 0.0
  %117 = vmatpush2.msra.mxu0 0.0
  %118 = vmatprep.subr.mxu0 0.0
  %119 = vmatpush2.msra.mxu0 0.0
  %120 = vmatprep.subr.mxu0 0.0
  %121 = vmatpush2.msra.mxu0 0.0
  %122 = vmatprep.mubr.f32.mxu0 0.0
  %123 = vmatmul.mubr.f32.gmra.mxu0 %v53
  %v124 = vpop.f32.mrf.mxu0
  %v125 = vadd.f32 %v49, %v124
  %v126 = vpop.f32.mrf.mxu0
  %127 = vmatprep.mubr.f32.mxu0 0.0
  %128 = vmatmul.mubr.f32.gmra.mxu0 %v56
  %v129 = vpop.f32.mrf.mxu0
  %v130 = vadd.f32 %v49, %v129
  %v131 = vpop.f32.mrf.mxu0
  %132 = vdwg.mxu0
  %v133 = vtanh.pop %v125
  %v134 = vtanh.pop %v130
  %v135 = vld [vmem:[%s3] sm:$0xff]
  %v136 = vld [vmem:[%s3 + $0x8] sm:$0xff]
  %v137 = vld [vmem:[%s3 + $0x10] sm:$0xff]
  %v138 = vld [vmem:[%s3 + $0x18] sm:$0xff]
  %v139 = vld [vmem:[%s3 + $0x20] sm:$0xff]
  %v140 = vld [vmem:[%s3 + $0x28] sm:$0xff]
  %v141 = vld [vmem:[%s3 + $0x30] sm:$0x3]
  %v142 = vld [vmem:[%s4] sm:$0x1]
  %v144 = vlaneseq
  %v145 = vshrl.u32 %v144, 7
  %v146 = vsub.s32 0, %v145
  %v147 = vrot.slane %v142, %v146
  %vm149 = vcmask 408576
  %v151 = vsel %vm149, %v133, 0
  %v154 = vsel %vm149, %v134, 0
  %vm156 = vcmask 1041408
  %v158 = vsel %vm156, %v141, 0
  %160 = vmatprep.subr.mxu0 0.0
  %161 = vmatpush1.msra.mxu0 0.0
  %162 = vmatprep.subr.mxu0 0.0
  %163 = vmatpush1.msra.mxu0 0.0
  %164 = vmatprep.subr.mxu0 0.0
  %165 = vmatpush1.msra.mxu0 0.0
  %166 = vmatprep.subr.mxu0 0.0
  %167 = vmatpush1.msra.mxu0 0.0
  %168 = vmatprep.subr.mxu0 0.0
  %169 = vmatpush1.msra.mxu0 0.0
  %170 = vmatprep.subr.mxu0 0.0
  %171 = vmatpush1.msra.mxu0 0.0
  %172 = vmatprep.subr.mxu0 0.0
  %173 = vmatpush1.msra.mxu0 0.0
  %174 = vmatprep.subr.mxu0 0.0
  %175 = vmatpush1.msra.mxu0 0.0
  %176 = vmatprep.subr.mxu0 0.0
  %177 = vmatpush1.msra.mxu0 0.0
  %178 = vmatprep.subr.mxu0 0.0
  %179 = vmatpush1.msra.mxu0 %v158
  %180 = vmatprep.subr.mxu0 0.0
  %181 = vmatpush1.msra.mxu0 %v140
  %182 = vmatprep.subr.mxu0 0.0
  %183 = vmatpush1.msra.mxu0 %v139
  %184 = vmatprep.subr.mxu0 0.0
  %185 = vmatpush1.msra.mxu0 %v138
  %186 = vmatprep.subr.mxu0 0.0
  %187 = vmatpush1.msra.mxu0 %v137
  %188 = vmatprep.subr.mxu0 0.0
  %189 = vmatpush1.msra.mxu0 %v136
  %190 = vmatprep.subr.mxu0 0.0
  %191 = vmatpush1.msra.mxu0 %v135
  %192 = vmatprep.subr.mxu0 0.0
  %193 = vmatpush2.msra.mxu0 0.0
  %194 = vmatprep.subr.mxu0 0.0
  %195 = vmatpush2.msra.mxu0 0.0
  %196 = vmatprep.subr.mxu0 0.0
  %197 = vmatpush2.msra.mxu0 0.0
  %198 = vmatprep.subr.mxu0 0.0
  %199 = vmatpush2.msra.mxu0 0.0
  %200 = vmatprep.subr.mxu0 0.0
  %201 = vmatpush2.msra.mxu0 0.0
  %202 = vmatprep.subr.mxu0 0.0
  %203 = vmatpush2.msra.mxu0 0.0
  %204 = vmatprep.subr.mxu0 0.0
  %205 = vmatpush2.msra.mxu0 0.0
  %206 = vmatprep.subr.mxu0 0.0
  %207 = vmatpush2.msra.mxu0 0.0
  %208 = vmatprep.subr.mxu0 0.0
  %209 = vmatpush2.msra.mxu0 0.0
  %210 = vmatprep.subr.mxu0 0.0
  %211 = vmatpush2.msra.mxu0 0.0
  %212 = vmatprep.subr.mxu0 0.0
  %213 = vmatpush2.msra.mxu0 0.0
  %214 = vmatprep.subr.mxu0 0.0
  %215 = vmatpush2.msra.mxu0 0.0
  %216 = vmatprep.subr.mxu0 0.0
  %217 = vmatpush2.msra.mxu0 0.0
  %218 = vmatprep.subr.mxu0 0.0
  %219 = vmatpush2.msra.mxu0 0.0
  %220 = vmatprep.subr.mxu0 0.0
  %221 = vmatpush2.msra.mxu0 0.0
  %222 = vmatprep.subr.mxu0 0.0
  %223 = vmatpush2.msra.mxu0 0.0
  %224 = vmatprep.mubr.f32.mxu0 0.0
  %225 = vmatmul.mubr.f32.gmra.mxu0 %v151
  %v226 = vpop.f32.mrf.mxu0
  %v227 = vadd.f32 %v147, %v226
  %v228 = vpop.f32.mrf.mxu0
  %229 = vmatprep.mubr.f32.mxu0 0.0
  %230 = vmatmul.mubr.f32.gmra.mxu0 %v154
  %v231 = vpop.f32.mrf.mxu0
  %v232 = vadd.f32 %v147, %v231
  %v233 = vpop.f32.mrf.mxu0
  %234 = vdwg.mxu0
  %v235 = vtanh.pop %v227
  %v236 = vtanh.pop %v232
  %v237 = vld [vmem:[%s5] sm:$0xff]
  %v238 = vld [vmem:[%s5 + $0x8] sm:$0xff]
  %v239 = vld [vmem:[%s5 + $0x10] sm:$0xff]
  %v240 = vld [vmem:[%s5 + $0x18] sm:$0xff]
  %v241 = vld [vmem:[%s5 + $0x20] sm:$0xff]
  %v242 = vld [vmem:[%s6] sm:$0x1]
  %v244 = vlaneseq
  %v245 = vshrl.u32 %v244, 7
  %v246 = vsub.s32 0, %v245
  %v247 = vrot.slane %v242, %v246
  %vm249 = vcmask 326656
  %v251 = vsel %vm249, %v235, 0
  %v254 = vsel %vm249, %v236, 0
  %256 = vmatprep.subr.mxu0 0.0
  %257 = vmatpush1.msra.mxu0 0.0
  %258 = vmatprep.subr.mxu0 0.0
  %259 = vmatpush1.msra.mxu0 0.0
  %260 = vmatprep.subr.mxu0 0.0
  %261 = vmatpush1.msra.mxu0 0.0
  %262 = vmatprep.subr.mxu0 0.0
  %263 = vmatpush1.msra.mxu0 0.0
  %264 = vmatprep.subr.mxu0 0.0
  %265 = vmatpush1.msra.mxu0 0.0
  %266 = vmatprep.subr.mxu0 0.0
  %267 = vmatpush1.msra.mxu0 0.0
  %268 = vmatprep.subr.mxu0 0.0
  %269 = vmatpush1.msra.mxu0 0.0
  %270 = vmatprep.subr.mxu0 0.0
  %271 = vmatpush1.msra.mxu0 0.0
  %272 = vmatprep.subr.mxu0 0.0
  %273 = vmatpush1.msra.mxu0 0.0
  %274 = vmatprep.subr.mxu0 0.0
  %275 = vmatpush1.msra.mxu0 0.0
  %276 = vmatprep.subr.mxu0 0.0
  %277 = vmatpush1.msra.mxu0 0.0
  %278 = vmatprep.subr.mxu0 0.0
  %279 = vmatpush1.msra.mxu0 %v241
  %280 = vmatprep.subr.mxu0 0.0
  %281 = vmatpush1.msra.mxu0 %v240
  %282 = vmatprep.subr.mxu0 0.0
  %283 = vmatpush1.msra.mxu0 %v239
  %284 = vmatprep.subr.mxu0 0.0
  %285 = vmatpush1.msra.mxu0 %v238
  %286 = vmatprep.subr.mxu0 0.0
  %287 = vmatpush1.msra.mxu0 %v237
  %288 = vmatprep.subr.mxu0 0.0
  %289 = vmatpush2.msra.mxu0 0.0
  %290 = vmatprep.subr.mxu0 0.0
  %291 = vmatpush2.msra.mxu0 0.0
  %292 = vmatprep.subr.mxu0 0.0
  %293 = vmatpush2.msra.mxu0 0.0
  %294 = vmatprep.subr.mxu0 0.0
  %295 = vmatpush2.msra.mxu0 0.0
  %296 = vmatprep.subr.mxu0 0.0
  %297 = vmatpush2.msra.mxu0 0.0
  %298 = vmatprep.subr.mxu0 0.0
  %299 = vmatpush2.msra.mxu0 0.0
  %300 = vmatprep.subr.mxu0 0.0
  %301 = vmatpush2.msra.mxu0 0.0
  %302 = vmatprep.subr.mxu0 0.0
  %303 = vmatpush2.msra.mxu0 0.0
  %304 = vmatprep.subr.mxu0 0.0
  %305 = vmatpush2.msra.mxu0 0.0
  %306 = vmatprep.subr.mxu0 0.0
  %307 = vmatpush2.msra.mxu0 0.0
  %308 = vmatprep.subr.mxu0 0.0
  %309 = vmatpush2.msra.mxu0 0.0
  %310 = vmatprep.subr.mxu0 0.0
  %311 = vmatpush2.msra.mxu0 0.0
  %312 = vmatprep.subr.mxu0 0.0
  %313 = vmatpush2.msra.mxu0 0.0
  %314 = vmatprep.subr.mxu0 0.0
  %315 = vmatpush2.msra.mxu0 0.0
  %316 = vmatprep.subr.mxu0 0.0
  %317 = vmatpush2.msra.mxu0 0.0
  %318 = vmatprep.subr.mxu0 0.0
  %319 = vmatpush2.msra.mxu0 0.0
  %320 = vmatprep.mubr.f32.mxu0 0.0
  %321 = vmatmul.mubr.f32.gmra.mxu0 %v251
  %v322 = vpop.f32.mrf.mxu0
  %v323 = vadd.f32 %v247, %v322
  %v324 = vpop.f32.mrf.mxu0
  %325 = vmatprep.mubr.f32.mxu0 0.0
  %326 = vmatmul.mubr.f32.gmra.mxu0 %v254
  %v327 = vpop.f32.mrf.mxu0
  %v328 = vadd.f32 %v247, %v327
  %v329 = vpop.f32.mrf.mxu0
  %330 = vdwg.mxu0
  %v331 = vtanh.pop %v323
  %v332 = vtanh.pop %v328
  %v333 = vld [vmem:[%s7] sm:$0xff]
  %v334 = vld [vmem:[%s7 + $0x8] sm:$0xff]
  %v335 = vld [vmem:[%s7 + $0x10] sm:$0xf]
  %v336 = vld [vmem:[%s8] sm:$0x1]
  %v338 = vlaneseq
  %v339 = vshrl.u32 %v338, 7
  %v340 = vsub.s32 0, %v339
  %v341 = vrot.slane %v336, %v340
  %vm343 = vcmask 162816
  %v345 = vsel %vm343, %v331, 0
  %v348 = vsel %vm343, %v332, 0
  %vm350 = vcmask 1043456
  %v352 = vsel %vm350, %v335, 0
  %354 = vmatprep.subr.mxu0 0.0
  %355 = vmatpush1.msra.mxu0 0.0
  %356 = vmatprep.subr.mxu0 0.0
  %357 = vmatpush1.msra.mxu0 0.0
  %358 = vmatprep.subr.mxu0 0.0
  %359 = vmatpush1.msra.mxu0 0.0
  %360 = vmatprep.subr.mxu0 0.0
  %361 = vmatpush1.msra.mxu0 0.0
  %362 = vmatprep.subr.mxu0 0.0
  %363 = vmatpush1.msra.mxu0 0.0
  %364 = vmatprep.subr.mxu0 0.0
  %365 = vmatpush1.msra.mxu0 0.0
  %366 = vmatprep.subr.mxu0 0.0
  %367 = vmatpush1.msra.mxu0 0.0
  %368 = vmatprep.subr.mxu0 0.0
  %369 = vmatpush1.msra.mxu0 0.0
  %370 = vmatprep.subr.mxu0 0.0
  %371 = vmatpush1.msra.mxu0 0.0
  %372 = vmatprep.subr.mxu0 0.0
  %373 = vmatpush1.msra.mxu0 0.0
  %374 = vmatprep.subr.mxu0 0.0
  %375 = vmatpush1.msra.mxu0 0.0
  %376 = vmatprep.subr.mxu0 0.0
  %377 = vmatpush1.msra.mxu0 0.0
  %378 = vmatprep.subr.mxu0 0.0
  %379 = vmatpush1.msra.mxu0 0.0
  %380 = vmatprep.subr.mxu0 0.0
  %381 = vmatpush1.msra.mxu0 %v352
  %382 = vmatprep.subr.mxu0 0.0
  %383 = vmatpush1.msra.mxu0 %v334
  %384 = vmatprep.subr.mxu0 0.0
  %385 = vmatpush1.msra.mxu0 %v333
  %386 = vmatprep.subr.mxu0 0.0
  %387 = vmatpush2.msra.mxu0 0.0
  %388 = vmatprep.subr.mxu0 0.0
  %389 = vmatpush2.msra.mxu0 0.0
  %390 = vmatprep.subr.mxu0 0.0
  %391 = vmatpush2.msra.mxu0 0.0
  %392 = vmatprep.subr.mxu0 0.0
  %393 = vmatpush2.msra.mxu0 0.0
  %394 = vmatprep.subr.mxu0 0.0
  %395 = vmatpush2.msra.mxu0 0.0
  %396 = vmatprep.subr.mxu0 0.0
  %397 = vmatpush2.msra.mxu0 0.0
  %398 = vmatprep.subr.mxu0 0.0
  %399 = vmatpush2.msra.mxu0 0.0
  %400 = vmatprep.subr.mxu0 0.0
  %401 = vmatpush2.msra.mxu0 0.0
  %402 = vmatprep.subr.mxu0 0.0
  %403 = vmatpush2.msra.mxu0 0.0
  %404 = vmatprep.subr.mxu0 0.0
  %405 = vmatpush2.msra.mxu0 0.0
  %406 = vmatprep.subr.mxu0 0.0
  %407 = vmatpush2.msra.mxu0 0.0
  %408 = vmatprep.subr.mxu0 0.0
  %409 = vmatpush2.msra.mxu0 0.0
  %410 = vmatprep.subr.mxu0 0.0
  %411 = vmatpush2.msra.mxu0 0.0
  %412 = vmatprep.subr.mxu0 0.0
  %413 = vmatpush2.msra.mxu0 0.0
  %414 = vmatprep.subr.mxu0 0.0
  %415 = vmatpush2.msra.mxu0 0.0
  %416 = vmatprep.subr.mxu0 0.0
  %417 = vmatpush2.msra.mxu0 0.0
  %418 = vmatprep.mubr.f32.mxu0 0.0
  %419 = vmatmul.mubr.f32.gmra.mxu0 %v345
  %v420 = vpop.f32.mrf.mxu0
  %v421 = vadd.f32 %v341, %v420
  %v422 = vpop.f32.mrf.mxu0
  %423 = vmatprep.mubr.f32.mxu0 0.0
  %424 = vmatmul.mubr.f32.gmra.mxu0 %v348
  %v425 = vpop.f32.mrf.mxu0
  %v426 = vadd.f32 %v341, %v425
  %v427 = vpop.f32.mrf.mxu0
  %428 = vdwg.mxu0
  %v429 = vtanh.pop %v421
  %v430 = vtanh.pop %v426
  %v431 = vld [vmem:[%s9] sm:$0xff]
  %v432 = vld [vmem:[%s9 + $0x8] sm:$0x3]
  %v433 = vld [vmem:[%s10] sm:$0x1]
  %v435 = vlaneseq
  %v436 = vshrl.u32 %v435, 7
  %v437 = vsub.s32 0, %v436
  %v438 = vrot.slane %v433, %v437
  %vm440 = vcmask 80896
  %v442 = vsel %vm440, %v429, 0
  %v445 = vsel %vm440, %v430, 0
  %v448 = vsel %vm156, %v432, 0
  %450 = vmatprep.subr.mxu0 0.0
  %451 = vmatpush1.msra.mxu0 0.0
  %452 = vmatprep.subr.mxu0 0.0
  %453 = vmatpush1.msra.mxu0 0.0
  %454 = vmatprep.subr.mxu0 0.0
  %455 = vmatpush1.msra.mxu0 0.0
  %456 = vmatprep.subr.mxu0 0.0
  %457 = vmatpush1.msra.mxu0 0.0
  %458 = vmatprep.subr.mxu0 0.0
  %459 = vmatpush1.msra.mxu0 0.0
  %460 = vmatprep.subr.mxu0 0.0
  %461 = vmatpush1.msra.mxu0 0.0
  %462 = vmatprep.subr.mxu0 0.0
  %463 = vmatpush1.msra.mxu0 0.0
  %464 = vmatprep.subr.mxu0 0.0
  %465 = vmatpush1.msra.mxu0 0.0
  %466 = vmatprep.subr.mxu0 0.0
  %467 = vmatpush1.msra.mxu0 0.0
  %468 = vmatprep.subr.mxu0 0.0
  %469 = vmatpush1.msra.mxu0 0.0
  %470 = vmatprep.subr.mxu0 0.0
  %471 = vmatpush1.msra.mxu0 0.0
  %472 = vmatprep.subr.mxu0 0.0
  %473 = vmatpush1.msra.mxu0 0.0
  %474 = vmatprep.subr.mxu0 0.0
  %475 = vmatpush1.msra.mxu0 0.0
  %476 = vmatprep.subr.mxu0 0.0
  %477 = vmatpush1.msra.mxu0 0.0
  %478 = vmatprep.subr.mxu0 0.0
  %479 = vmatpush1.msra.mxu0 %v448
  %480 = vmatprep.subr.mxu0 0.0
  %481 = vmatpush1.msra.mxu0 %v431
  %482 = vmatprep.subr.mxu0 0.0
  %483 = vmatpush2.msra.mxu0 0.0
  %484 = vmatprep.subr.mxu0 0.0
  %485 = vmatpush2.msra.mxu0 0.0
  %486 = vmatprep.subr.mxu0 0.0
  %487 = vmatpush2.msra.mxu0 0.0
  %488 = vmatprep.subr.mxu0 0.0
  %489 = vmatpush2.msra.mxu0 0.0
  %490 = vmatprep.subr.mxu0 0.0
  %491 = vmatpush2.msra.mxu0 0.0
  %492 = vmatprep.subr.mxu0 0.0
  %493 = vmatpush2.msra.mxu0 0.0
  %494 = vmatprep.subr.mxu0 0.0
  %495 = vmatpush2.msra.mxu0 0.0
  %496 = vmatprep.subr.mxu0 0.0
  %497 = vmatpush2.msra.mxu0 0.0
  %498 = vmatprep.subr.mxu0 0.0
  %499 = vmatpush2.msra.mxu0 0.0
  %500 = vmatprep.subr.mxu0 0.0
  %501 = vmatpush2.msra.mxu0 0.0
  %502 = vmatprep.subr.mxu0 0.0
  %503 = vmatpush2.msra.mxu0 0.0
  %504 = vmatprep.subr.mxu0 0.0
  %505 = vmatpush2.msra.mxu0 0.0
  %506 = vmatprep.subr.mxu0 0.0
  %507 = vmatpush2.msra.mxu0 0.0
  %508 = vmatprep.subr.mxu0 0.0
  %509 = vmatpush2.msra.mxu0 0.0
  %510 = vmatprep.subr.mxu0 0.0
  %511 = vmatpush2.msra.mxu0 0.0
  %512 = vmatprep.subr.mxu0 0.0
  %513 = vmatpush2.msra.mxu0 0.0
  %514 = vmatprep.mubr.f32.mxu0 0.0
  %515 = vmatmul.mubr.f32.gmra.mxu0 %v442
  %v516 = vpop.f32.mrf.mxu0
  %v517 = vadd.f32 %v438, %v516
  %v518 = vpop.f32.mrf.mxu0
  %519 = vmatprep.mubr.f32.mxu0 0.0
  %520 = vmatmul.mubr.f32.gmra.mxu0 %v445
  %v521 = vpop.f32.mrf.mxu0
  %v522 = vadd.f32 %v438, %v521
  %v523 = vpop.f32.mrf.mxu0
  %524 = vdwg.mxu0
  %vm525 = vcmask 64512
  %526 = vst.msk [vmem:[%s11] sm:$0xff] %vm525, %v517
  %vm527 = vcmask 58368
  %528 = vst.msk [vmem:[%s11 + $0x8] sm:$0x3] %vm527, %v522
  // Predicated region
  $region46: #{_forward_impl.1} parent=0 // pred_check
    _
  $region47: #{_forward_impl.1} parent=0 // pred_check_branch
    %530 = sbr.rel (0) target = $region49
  $region48: #{_forward_impl.1} parent=0 // pred_region
    _
  $region49: #{_forward_impl.1} parent=0 // pred_fallthru
    _
  // Predicated region
  $region50: #{_forward_impl.1} parent=0 // pred_check
    _
  $region51: #{_forward_impl.1} parent=0 // pred_check_branch
    %532 = sbr.rel (0) target = $region53
  $region52: #{_forward_impl.1} parent=0 // pred_region
    _
  $region53: #{_forward_impl.1} parent=0 // pred_fallthru
    _

</llo_original>
